<compile_context>
chip_gen: v6e
topology: v6e:2x2x1
jax: 0.10.0
libtpu: 0.0.40
codegen_flags: <defaults>
</compile_context>

<pallas_src>
import functools

import jax
import jax.numpy as jnp
from jax.experimental import pallas as pl
from jax.experimental.pallas import tpu as pltpu


def _round_up(x, m):
    return (x + m - 1) // m * m


# ----------------------------------------------------------------------------
# Pallas kernel: o_tile = x_tile @ W[:, cols] + pos_bias[rows, cols]
# ----------------------------------------------------------------------------
def _patch_embed_kernel(x_ref, w_ref, pb_ref, o_ref, *,
                        TM, TH, blocks_per_seq, tile_h):
    # x_ref : (TM, P)    bf16, streamed per M block
    # w_ref : (P,  Hp)   bf16, VMEM-resident (constant index_map)
    # pb_ref: (Npb, Hp)  pos-emb with bias folded in, resident (or streamed fallback)
    # o_ref : (TM, TH)   f32 / bf16, streamed per (M[, H]) block
    if tile_h:
        col = pl.multiple_of(pl.program_id(1) * TH, 128)
        w = w_ref[:, pl.ds(col, TH)]
    else:
        w = w_ref[...]

    acc = jnp.dot(x_ref[...], w, preferred_element_type=jnp.float32)

    if blocks_per_seq > 1:
        row = pl.multiple_of((pl.program_id(0) % blocks_per_seq) * TM, TM)
        if tile_h:
            pb = pb_ref[pl.ds(row, TM), pl.ds(col, TH)]
        else:
            pb = pb_ref[pl.ds(row, TM), :]
    else:
        if tile_h:
            pb = pb_ref[:, pl.ds(col, TH)]
        else:
            pb = pb_ref[...]

    o_ref[...] = (acc + pb.astype(jnp.float32)).astype(o_ref.dtype)


# ----------------------------------------------------------------------------
# Tiling / VMEM planning
# ----------------------------------------------------------------------------
def _vmem_budget_bytes():
    """~75% of per-core VMEM: ~48 MiB on v7x, ~96 MiB on v5e/v6e."""
    try:
        phys = int(pltpu.get_tpu_info().vmem_capacity_bytes)
    except Exception:
        phys = 64 << 20                       # conservative (v7x) fallback
    return max(phys * 3 // 4, 32 << 20)


def _plan_m_tiling(M, N, target=512):
    """Pick the M (row) tile TM.  Returns (TM, mode, aux).

    mode "mul"   : TM = k*N (tile covers k whole sequences); aux = k.
                   pos table is pre-tiled to TM rows and kept resident.
    mode "div"   : TM divides N; aux = blocks_per_seq = N // TM.
                   pos table [N, Hp] is resident; rows sliced in-kernel.
    mode "stream": no nice relation to N; pos table expanded per-row (bf16)
                   and streamed per M block (fallback); aux = 1.

    TM is always a multiple of 16 (bf16 sublane tiling), never pads M by more
    than one tile, and leaves >= 2 M blocks when possible (v7x megacore).
    """
    Mp16 = _round_up(M, 16)
    cap = min(target, Mp16)
    if Mp16 >= 32:                            # keep >= 2 blocks for megacore
        cap = min(cap, _round_up(-(-Mp16 // 2), 16))
    cap = max(cap, 16)

    # (a) whole-sequence tiles: TM = k*N, multiple of 16, <= cap
    k = cap // N
    while k >= 1 and (k * N) % 16 != 0:
        k -= 1
    best_mul = k * N if k >= 1 else None

    # (b) TM divides N, multiple of 16, <= cap
    best_div = None
    for tm in range(min(cap, N), 15, -1):
        if N % tm == 0 and tm % 16 == 0:
            best_div = tm
            break

    if best_mul is not None and (best_div is None or best_mul >= best_div):
        return best_mul, "mul", best_mul // N
    if best_div is not None:
        return best_div, "div", N // best_div

    # (c) fallback: multiple-of-16 tile, preferring one that avoids padding
    for tm in range(cap, 15, -16):
        if Mp16 % tm == 0:
            return tm, "stream", 1
    return cap, "stream", 1


# ----------------------------------------------------------------------------
# pallas_call wrapper
# ----------------------------------------------------------------------------
def patch_embedding_pallas(patches, weight_io, pos_bias, *, out_dtype=jnp.float32):
    """patches: [M, P] (M = B*N), weight_io: [P, H], pos_bias: [N, H] (f32).

    Returns [M, H] = patches @ weight_io + pos_bias (broadcast over batch).
    """
    M, P = patches.shape
    H = weight_io.shape[1]
    N = pos_bias.shape[0]
    out_bytes = jnp.dtype(out_dtype).itemsize

    Hp = _round_up(H, 128)                     # lane-dense columns
    TM, mode, aux = _plan_m_tiling(M, N)
    Mp = _round_up(M, TM)
    grid_m = Mp // TM
    blocks_per_seq = aux if mode == "div" else 1

    # bf16 MXU operands (f32 accumulation inside the kernel)
    x = patches.astype(jnp.bfloat16)
    if Mp != M:
        x = jnp.pad(x, ((0, Mp - M), (0, 0)))
    w = weight_io.astype(jnp.bfloat16)
    pb = pos_bias.astype(jnp.float32)
    if Hp != H:
        w = jnp.pad(w, ((0, 0), (0, Hp - H)))
        pb = jnp.pad(pb, ((0, 0), (0, Hp - H)))

    if mode == "mul" and aux > 1:
        pb = jnp.tile(pb, (aux, 1))                              # [TM, Hp], resident
    elif mode == "stream":
        reps = -(-Mp // N)
        pb = jnp.tile(pb, (reps, 1))[:Mp].astype(jnp.bfloat16)   # per-row, streamed

    pb_rows = pb.shape[0]
    pb_item = pb.dtype.itemsize

    # ---- VMEM budget: resident weight + pos table, double-buffered x / out ----
    budget = _vmem_budget_bytes()

    def vmem_need(th):
        resident = 2 * P * Hp * 2 + 2 * pb_rows * Hp * pb_item
        streamed = 2 * TM * P * 2 + 2 * TM * th * out_bytes
        return resident + streamed + (2 << 20)

    tile_h = vmem_need(Hp) > budget
    if tile_h:
        TH = 128
        for cand in (512, 384, 256, 128):
            if Hp % cand == 0 and vmem_need(cand) <= budget:
                TH = cand
                break
        # TODO(synk): shrink TM as well for pathologically large Hp.
    else:
        TH = Hp

    vmem_limit = int(min(budget, max(vmem_need(TH), 16 << 20)))

    if tile_h:
        grid = (grid_m, Hp // TH)
        x_spec = pl.BlockSpec((TM, P), lambda m, h: (m, 0))
        w_spec = pl.BlockSpec((P, Hp), lambda m, h: (0, 0))          # resident
        if mode == "stream":
            pb_spec = pl.BlockSpec((TM, Hp), lambda m, h: (m, 0))
        else:
            pb_spec = pl.BlockSpec((pb_rows, Hp), lambda m, h: (0, 0))  # resident
        out_spec = pl.BlockSpec((TM, TH), lambda m, h: (m, h))
        dims = ("parallel", "parallel")
    else:
        grid = (grid_m,)
        x_spec = pl.BlockSpec((TM, P), lambda m: (m, 0))
        w_spec = pl.BlockSpec((P, Hp), lambda m: (0, 0))             # resident
        if mode == "stream":
            pb_spec = pl.BlockSpec((TM, Hp), lambda m: (m, 0))
        else:
            pb_spec = pl.BlockSpec((pb_rows, Hp), lambda m: (0, 0))  # resident
        out_spec = pl.BlockSpec((TM, Hp), lambda m: (m, 0))
        dims = ("parallel",)

    kernel = functools.partial(
        _patch_embed_kernel, TM=TM, TH=TH,
        blocks_per_seq=blocks_per_seq, tile_h=tile_h)

    flops = 2 * Mp * P * Hp
    bytes_accessed = (x.size * x.dtype.itemsize + w.size * w.dtype.itemsize
                      + pb.size * pb.dtype.itemsize + Mp * Hp * out_bytes)

    out = pl.pallas_call(
        kernel,
        out_shape=jax.ShapeDtypeStruct((Mp, Hp), out_dtype),
        grid_spec=pltpu.PrefetchScalarGridSpec(
            num_scalar_prefetch=0,
            grid=grid,
            in_specs=[x_spec, w_spec, pb_spec],
            out_specs=out_spec,
        ),
        compiler_params=pltpu.CompilerParams(
            dimension_semantics=dims,
            vmem_limit_bytes=vmem_limit),
        cost_estimate=pl.CostEstimate(
            flops=flops, transcendentals=0, bytes_accessed=bytes_accessed),
    )(x, w, pb)

    return out[:M, :H]


# ----------------------------------------------------------------------------
# Plain-JAX glue: patch rearrange, positional embedding, parameter init
# ----------------------------------------------------------------------------
def rearrange_patches(x, ph, pw):
    # NCHW [B, C, H, W] -> [B, (nh nw), (ph pw c)]  (matches einops rearrange)
    B, C, Hi, Wi = x.shape
    nh, nw = Hi // ph, Wi // pw
    x = x.reshape(B, C, nh, ph, nw, pw)
    x = jnp.transpose(x, (0, 2, 4, 3, 5, 1))          # b, nh, nw, ph, pw, c
    return x.reshape(B, nh * nw, ph * pw * C)


def get_patch_position_embedding(pos_emb_dim, grid_size):
    assert pos_emb_dim % 4 == 0
    gh, gw = grid_size
    grid_h = jnp.arange(gh, dtype=jnp.float32)
    grid_w = jnp.arange(gw, dtype=jnp.float32)
    mesh_h, mesh_w = jnp.meshgrid(grid_h, grid_w, indexing='ij')
    grid_h_positions = mesh_h.reshape(-1)
    grid_w_positions = mesh_w.reshape(-1)
    factor = 10000.0 ** (jnp.arange(pos_emb_dim // 4, dtype=jnp.float32)
                         / (pos_emb_dim // 4))
    grid_h_emb = grid_h_positions[:, None] / factor[None, :]
    grid_h_emb = jnp.concatenate([jnp.sin(grid_h_emb), jnp.cos(grid_h_emb)], axis=-1)
    grid_w_emb = grid_w_positions[:, None] / factor[None, :]
    grid_w_emb = jnp.concatenate([jnp.sin(grid_w_emb), jnp.cos(grid_w_emb)], axis=-1)
    return jnp.concatenate([grid_h_emb, grid_w_emb], axis=-1)   # [gh*gw, pos_emb_dim]


def xavier_uniform(key, out_features, in_features):
    # matches nn.init.xavier_uniform_ for a Linear weight of shape [out, in]
    limit = jnp.sqrt(6.0 / (in_features + out_features))
    return jax.random.uniform(key, (out_features, in_features),
                              dtype=jnp.float32, minval=-limit, maxval=limit)


@functools.partial(jax.jit,
                   static_argnames=("patch_height", "patch_width", "hidden_size"))
def patch_embedding_forward(x, weight_oi, bias, *, patch_height, patch_width,
                            hidden_size):
    B, C, Hi, Wi = x.shape
    nh, nw = Hi // patch_height, Wi // patch_width
    N = nh * nw
    # Cast to bf16 BEFORE patchification: the transpose moves half the bytes.
    # TODO(synk): fuse the (nh, nw, ph, pw, c) patchification gather into the
    # kernel's index_map to avoid materializing the [B, N, P] tensor in HBM.
    patches = rearrange_patches(x.astype(jnp.bfloat16), patch_height, patch_width)
    pos = get_patch_position_embedding(hidden_size, (nh, nw))        # [N, H] f32
    pos_bias = pos + bias[None, :].astype(jnp.float32)                # fold bias
    weight_io = weight_oi.astype(jnp.float32).T                       # [P, H]
    out = patch_embedding_pallas(patches.reshape(B * N, -1), weight_io, pos_bias,
                                 out_dtype=jnp.float32)
    return out.reshape(B, N, hidden_size)


# ----------------------------------------------------------------------------
if __name__ == "__main__":
    # Module config: 16x16 image, 4 channels, 4x4 patches, hidden=32
    image_height, image_width = 16, 16
    im_channels = 4
    patch_height, patch_width = 4, 4
    hidden_size = 32
    batch = 2

    patch_dim = im_channels * patch_height * patch_width  # 64

    key = jax.random.PRNGKey(0)
    kx, kw = jax.random.split(key)

    x = jax.random.normal(kx, (batch, im_channels, image_height, image_width),
                          dtype=jnp.float32)
    weight = xavier_uniform(kw, hidden_size, patch_dim)   # [out, in] like torch
    bias = jnp.zeros((hidden_size,), dtype=jnp.float32)

    out = patch_embedding_forward(x, weight, bias,
                                  patch_height=patch_height,
                                  patch_width=patch_width,
                                  hidden_size=hidden_size)
    out = jax.block_until_ready(out)

    # sanity check against a pure-f32 JAX reference
    patches = rearrange_patches(x, patch_height, patch_width)
    pos = get_patch_position_embedding(
        hidden_size, (image_height // patch_height, image_width // patch_width))
    ref = jnp.einsum('bnp,ph->bnh', patches, weight.T) + bias[None, None, :] + pos[None]

    n_patches = (image_height // patch_height) * (image_width // patch_width)
    assert out.shape == (batch, n_patches, hidden_size)
    # bf16 matmul operands / bf16 patch cast -> relaxed tolerance vs f32 reference
    assert jnp.allclose(out, ref, atol=5e-2, rtol=5e-2), \
        float(jnp.max(jnp.abs(out - ref)))

    print("KERNEL_OK")
</pallas_src>

<mosaic_0001>
module attributes {stable_mosaic.version = 11 : i64} {
  func.func @_patch_embed_kernel(%arg0: i32, %arg1: memref<16x64xbf16, #tpu.memory_space<vmem>>, %arg2: memref<64x128xbf16, #tpu.memory_space<vmem>>, %arg3: memref<16x128xf32, #tpu.memory_space<vmem>>, %arg4: memref<16x128xf32, #tpu.memory_space<vmem>>) attributes {dimension_semantics = [#tpu.dimension_semantics<parallel>], iteration_bounds = array<i64: 2>, scalar_prefetch = 0 : i64, scratch_operands = 0 : i64, tpu.core_type = #tpu.core_type<tc>, window_params = [{transform_indices = @transform_0, window_bounds = array<i64: 16, 64>}, {pipeline_mode = #tpu.pipeline_mode<synchronous>, transform_indices = @transform_1, window_bounds = array<i64: 64, 128>}, {pipeline_mode = #tpu.pipeline_mode<synchronous>, transform_indices = @transform_2, window_bounds = array<i64: 16, 128>}, {transform_indices = @transform_3, window_bounds = array<i64: 16, 128>}]} {
    %c0 = arith.constant 0 : index
    %c0_0 = arith.constant 0 : index
    %0 = vector.load %arg2[%c0, %c0_0] : memref<64x128xbf16, #tpu.memory_space<vmem>>, vector<64x128xbf16>
    %c0_1 = arith.constant 0 : index
    %c0_2 = arith.constant 0 : index
    %1 = vector.load %arg1[%c0_1, %c0_2] : memref<16x64xbf16, #tpu.memory_space<vmem>>, vector<16x64xbf16>
    %cst = arith.constant dense<0.000000e+00> : vector<16x128xf32>
    %2 = tpu.matmul %1, %0, %cst {dimension_numbers = #tpu.dot_dimension_numbers<[1], [0], [0], [1], [0, 0, 1, 1], [], []>} : vector<16x64xbf16>, vector<64x128xbf16>, vector<16x128xf32> -> vector<16x128xf32>
    %c0_3 = arith.constant 0 : index
    %c0_4 = arith.constant 0 : index
    %3 = vector.load %arg3[%c0_3, %c0_4] : memref<16x128xf32, #tpu.memory_space<vmem>>, vector<16x128xf32>
    %4 = arith.addf %2, %3 : vector<16x128xf32>
    %c0_5 = arith.constant 0 : index
    %c0_6 = arith.constant 0 : index
    %5 = vector.load %arg4[%c0_5, %c0_6] : memref<16x128xf32, #tpu.memory_space<vmem>>, vector<16x128xf32>
    tpu.vector_store %arg4[%c0_5, %c0_6], %4 {strides = array<i32>} : memref<16x128xf32, #tpu.memory_space<vmem>>, vector<16x128xf32>,
    return
  }
  func.func @transform_0(%arg0: i32) -> (i32, i32) {
    %c0_i32 = arith.constant 0 : i32
    %c0_i32_0 = arith.constant 0 : i32
    return %arg0, %c0_i32 : i32, i32
  }
  func.func @transform_1(%arg0: i32) -> (i32, i32) {
    %c0_i32 = arith.constant 0 : i32
    %c0_i32_0 = arith.constant 0 : i32
    %c0_i32_1 = arith.constant 0 : i32
    return %c0_i32, %c0_i32_0 : i32, i32
  }
  func.func @transform_2(%arg0: i32) -> (i32, i32) {
    %c0_i32 = arith.constant 0 : i32
    %c0_i32_0 = arith.constant 0 : i32
    %c0_i32_1 = arith.constant 0 : i32
    return %c0_i32, %c0_i32_0 : i32, i32
  }
  func.func @transform_3(%arg0: i32) -> (i32, i32) {
    %c0_i32 = arith.constant 0 : i32
    %c0_i32_0 = arith.constant 0 : i32
    return %arg0, %c0_i32 : i32, i32
  }
}

</mosaic_0001>

<llo_original>
// kernel: div.17
$region0: #{div.17}
  %s0 = inlined_call_operand.vmem [shape: f32[4,4], index: 0, kind: input, shape index: {}]
  %s1 = inlined_call_operand.vmem [shape: f32[16], index: 1, kind: output, shape index: {}]
  $region1: #{div.17} parent=0
    #allocation0 [shape = 'u8[4096]{0}', space=vmem, size = 0x1000, scoped, tag = 'scoped mem for output reshape']
    #allocation1 [shape = 'u8[4096]{0}', space=vmem, size = 0x1000, scoped, tag = 'scoped mem for input reshape']
    %s3 = sshll.u32 1, 4
    %s4 = ssub.s32 %s3, 1
    %v5 = vld [vmem:[%s0] sm:%s4]
    %6 = vst [vmem:[#allocation1] sm:%s4] %v5
    %v7 = vld [vmem:[#allocation1] sm:$0x1]
    %vm8 = vcmask 31744
    %9 = vst.msk [vmem:[#allocation0] sm:$0x1] %vm8, %v7
    %s10 = scalar_lea.vmem [#allocation1], 3
    %v11 = vld [vmem:[%s10] sm:$0x1]
    %12 = vrot.lane.b32.xlu0 %v11, 12
    %v13 = vpop.permute.xlu0 %12
    %vm14 = vcmask 130144
    %15 = vst.msk [vmem:[#allocation0] sm:$0x1] %vm14, %v13
    %s16 = scalar_lea.vmem [#allocation1], 2
    %v17 = vld [vmem:[%s16] sm:$0x1]
    %18 = vrot.lane.b32.xlu0 %v17, 8
    %v19 = vpop.permute.xlu0 %18
    %vm20 = vcmask 97344
    %21 = vst.msk [vmem:[#allocation0] sm:$0x1] %vm20, %v19
    %s22 = scalar_lea.vmem [#allocation1], 1
    %v23 = vld [vmem:[%s22] sm:$0x1]
    %24 = vrot.lane.b32.xlu0 %v23, 4
    %v25 = vpop.permute.xlu0 %24
    %vm26 = vcmask 64544
    %27 = vst.msk [vmem:[#allocation0] sm:$0x1] %vm26, %v25
    %s29 = sshll.u32 1, 1
    %s30 = ssub.s32 %s29, 1
    %v32 = vld [vmem:[#allocation0] sm:%s30]
    %s33 = sshll.u32 1, 1
    %s34 = ssub.s32 %s33, 1
    %35 = vst [vmem:[%s1] sm:%s34] %v32

// kernel: patch_embedding_forward.1
$region0: #{patch_embedding_forward.1}
  #allocation0 [shape = 'u32[]', space=smem, size = 0x4, offset = 0x4, fixed_abs, tag = 'smem constant byte address 0x4 - core index']
  #allocation1 [shape = 'u32[144,128]{1,0:T(1,128)}', space=vmem, size = 0x12000, scoped, tag = 'internal scratch']
  %s0 = inlined_call_operand.vmem [shape: bf16[32,64], index: 0, kind: input, shape index: {}]
  %s1 = inlined_call_operand.vmem [shape: bf16[64,128], index: 1, kind: input, shape index: {}]
  %s2 = inlined_call_operand.vmem [shape: f32[16,128], index: 2, kind: input, shape index: {}]
  %s3 = inlined_call_operand.hbm [shape: f32[32,128], index: 3, kind: output, shape index: {}]
  %s4 = sld [smem:[#allocation0]]
  $region45: #{patch_embedding_forward.1} parent=0
    _
  %s6 = ssub.s32 1, %s4
  %s7 = scalar_select 0, %s6, %s4
  $region1: #{patch_embedding_forward.1} parent=0
    #allocation2 [shape = 'u8[16384]{0}', space=vmem, size = 0x4000, scoped, tag = 'output window, operand 0']
    #allocation3 [shape = 's32[2]{0}', space=sflag, size = 0x8, scoped, tag = 'scoped memory for patch_embedding_forward.1']
    %8 = vsyncpa [#allocation3], 0
    %s9 = scalar_lea.sflag [#allocation3], 1
    %10 = vsyncpa %s9, 0
    loop: start=0, step=1, limit=4
    $region2: #{patch_embedding_forward.1} parent=1 // loop_pre_header
      _
    $region3: #{patch_embedding_forward.1} parent=1 // loop_header
      %s12 = sphi 0, %s16
      %p13 = scmp.ge.s32.totalorder %s12, 4
      %s22 = sphi 0, %s24
      %s25 = sphi 0, %s22
      %s26 = sphi 0, %s25
      %s42 = sphi 0, %s26
      %s46 = sphi 0, %s46
      %s48 = sphi 0, %s46
      %s49 = sphi 0, %s48
      %s63 = sphi 0, %s49
      %s67 = sphi 0, %s67
      %s69 = sphi 0, %s67
      %s70 = sphi 0, %s69
      %s84 = sphi 0, %s70
      %s90 = sphi 0, %s92
      %s93 = sphi 0, %s90
      %s94 = sphi 0, %s93
      %s110 = sphi 0, %s94
    $region4: #{patch_embedding_forward.1} parent=1 // loop_header_branch
      %15 = sbr.rel (%p13) target = $region8
    $region5: #{patch_embedding_forward.1} parent=1 // loop_body
      %s17 = ssub.s32 %s12, 1
      %s18 = ssub.s32 %s12, 2
      %s19 = sadd.s32 %s12, 1
      %s20 = ssub.s32 %s12, %s19
      %p21 = scmp.eq.s32.totalorder %s20, 0
      %s23 = sadd.s32 %s22, 1
      %s24 = scalar_select %p21, %s22, %s23
      %p27 = pneg %p21
      %p28 = scmp.eq.s32.totalorder %s12, 1
      %p29 = por %p27, %p28
      %p30 = scmp.ne.s32.totalorder %s22, %s25
      %p31 = scmp.eq.s32.totalorder %s12, 0
      %p32 = por %p30, %p31
      %p33 = scmp.ne.s32.totalorder %s22, %s25
      %p34 = scmp.eq.s32.totalorder %s17, 1
      %p35 = por %p33, %p34
      %p36 = scmp.ne.s32.totalorder %s25, %s26
      %p37 = scmp.eq.s32.totalorder %s17, 0
      %p38 = por %p36, %p37
      %p39 = scmp.ne.s32.totalorder %s25, %s26
      %p40 = scmp.eq.s32.totalorder %s18, 1
      %p41 = por %p39, %p40
      %p43 = scmp.ne.s32.totalorder %s26, %s42
      %p44 = scmp.eq.s32.totalorder %s18, 0
      %p45 = por %p43, %p44
      %s47 = sadd.s32 %s46, 1
      %p50 = scmp.eq.s32.totalorder %s12, 1
      %p51 = scmp.ne.s32.totalorder %s46, %s48
      %p52 = scmp.eq.s32.totalorder %s12, 0
      %p53 = por %p51, %p52
      %p54 = scmp.ne.s32.totalorder %s46, %s48
      %p55 = scmp.eq.s32.totalorder %s17, 1
      %p56 = por %p54, %p55
      %p57 = scmp.ne.s32.totalorder %s48, %s49
      %p58 = scmp.eq.s32.totalorder %s17, 0
      %p59 = por %p57, %p58
      %p60 = scmp.ne.s32.totalorder %s48, %s49
      %p61 = scmp.eq.s32.totalorder %s18, 1
      %p62 = por %p60, %p61
      %p64 = scmp.ne.s32.totalorder %s49, %s63
      %p65 = scmp.eq.s32.totalorder %s18, 0
      %p66 = por %p64, %p65
      %s68 = sadd.s32 %s67, 1
      %p71 = scmp.eq.s32.totalorder %s12, 1
      %p72 = scmp.ne.s32.totalorder %s67, %s69
      %p73 = scmp.eq.s32.totalorder %s12, 0
      %p74 = por %p72, %p73
      %p75 = scmp.ne.s32.totalorder %s67, %s69
      %p76 = scmp.eq.s32.totalorder %s17, 1
      %p77 = por %p75, %p76
      %p78 = scmp.ne.s32.totalorder %s69, %s70
      %p79 = scmp.eq.s32.totalorder %s17, 0
      %p80 = por %p78, %p79
      %p81 = scmp.ne.s32.totalorder %s69, %s70
      %p82 = scmp.eq.s32.totalorder %s18, 1
      %p83 = por %p81, %p82
      %p85 = scmp.ne.s32.totalorder %s70, %s84
      %p86 = scmp.eq.s32.totalorder %s18, 0
      %p87 = por %p85, %p86
      %s88 = ssub.s32 %s12, %s19
      %p89 = scmp.eq.s32.totalorder %s88, 0
      %s91 = sadd.s32 %s90, 1
      %s92 = scalar_select %p89, %s90, %s91
      %p95 = pneg %p89
      %p96 = scmp.eq.s32.totalorder %s12, 1
      %p97 = por %p95, %p96
      %p98 = scmp.ne.s32.totalorder %s90, %s93
      %p99 = scmp.eq.s32.totalorder %s12, 0
      %p100 = por %p98, %p99
      %p101 = scmp.ne.s32.totalorder %s90, %s93
      %p102 = scmp.eq.s32.totalorder %s17, 1
      %p103 = por %p101, %p102
      %p104 = scmp.ne.s32.totalorder %s93, %s94
      %p105 = scmp.eq.s32.totalorder %s17, 0
      %p106 = por %p104, %p105
      %p107 = scmp.ne.s32.totalorder %s93, %s94
      %p108 = scmp.eq.s32.totalorder %s18, 1
      %p109 = por %p107, %p108
      %p111 = scmp.ne.s32.totalorder %s94, %s110
      %p112 = scmp.eq.s32.totalorder %s18, 0
      %p113 = por %p111, %p112
      %p114 = scmp.le.s32.totalorder 1, %s12
      %p115 = scmp.lt.s32.totalorder %s12, 3
      %p116 = pnand %p114, %p115
      %p117 = pneg %p116
      // Predicated region
      $region9: #{patch_embedding_forward.1} parent=5 // pred_check
        _
      $region10: #{patch_embedding_forward.1} parent=5 // pred_check_branch
        %119 = sbr.rel (%p116) target = $region12
      $region11: #{patch_embedding_forward.1} parent=5 // pred_region
        %s120 = ssub.s32 %s12, 1
        // Predicated region
        $region13: #{patch_embedding_forward.1} parent=11 // pred_check
          %p121 = pneg %p59
        $region14: #{patch_embedding_forward.1} parent=11 // pred_check_branch
          %123 = sbr.rel (%p121) target = $region16
        $region15: #{patch_embedding_forward.1} parent=11 // pred_region
          _
        $region16: #{patch_embedding_forward.1} parent=11 // pred_fallthru
          _
        // Predicated region
        $region17: #{patch_embedding_forward.1} parent=11 // pred_check
          %p124 = pneg %p80
        $region18: #{patch_embedding_forward.1} parent=11 // pred_check_branch
          %126 = sbr.rel (%p124) target = $region20
        $region19: #{patch_embedding_forward.1} parent=11 // pred_region
          _
        $region20: #{patch_embedding_forward.1} parent=11 // pred_fallthru
          _
      $region12: #{patch_embedding_forward.1} parent=5 // pred_fallthru
        _
      %p127 = scmp.lt.s32.totalorder %s12, 2
      // Predicated region
      $region21: #{patch_embedding_forward.1} parent=5 // pred_check
        %p128 = pneg %p127
      $region22: #{patch_embedding_forward.1} parent=5 // pred_check_branch
        %130 = sbr.rel (%p128) target = $region24
      $region23: #{patch_embedding_forward.1} parent=5 // pred_region
        // Predicated region
        $region25: #{patch_embedding_forward.1} parent=23 // pred_check
          %p131 = pneg %p32
        $region26: #{patch_embedding_forward.1} parent=23 // pred_check_branch
          %133 = sbr.rel (%p131) target = $region28
        $region27: #{patch_embedding_forward.1} parent=23 // pred_region
          %s134 = smul.u32 2, %s12
          %p135 = scmp.lt.s32.totalorder %s134, 3
          %s136 = scalar_select %p135, %s134, 3
          %s137 = smul.addr %s136, 4
          %s138 = scalar_lea.vmem %s0, %s137
          %s139 = smul.u32 2, %s12
        $region28: #{patch_embedding_forward.1} parent=23 // pred_fallthru
          _
      $region24: #{patch_embedding_forward.1} parent=5 // pred_fallthru
        _
      %p140 = scmp.le.s32.totalorder 1, %s12
      %p141 = scmp.lt.s32.totalorder %s12, 3
      %p142 = pnand %p140, %p141
      %p143 = pneg %p142
      // Predicated region
      $region29: #{patch_embedding_forward.1} parent=5 // pred_check
        _
      $region30: #{patch_embedding_forward.1} parent=5 // pred_check_branch
        %145 = sbr.rel (%p142) target = $region32
      $region31: #{patch_embedding_forward.1} parent=5 // pred_region
        %s146 = ssub.s32 %s12, 1
        %s147 = smul.u32 2, %s17
        %p148 = scmp.lt.s32.totalorder %s147, 3
        %s149 = scalar_select %p148, %s147, 3
        %s150 = smul.addr %s149, 4
        %s151 = scalar_lea.vmem %s0, %s150
        %p152 = pneg %p38
        %p153 = pneg %p35
        %p154 = pneg %p59
        %p155 = pneg %p56
        %p156 = pneg %p80
        %p157 = pneg %p77
        %p158 = pneg %p106
        %p159 = pneg %p103
        %s160 = sand.u32 %s93, 1
        %s161 = scalar_lea.sflag [#allocation3], %s160
        %s162 = sand.u32 %s93, 1
        %s163 = smul.addr %s162, 16
        %s164 = scalar_lea.vmem [#allocation2], %s163
        %s165 = smul.u32 2, %s17
        %p166 = scmp.lt.s32.totalorder %s165, 3
        %s167 = scalar_select %p166, %s165, 3
        %s168 = smul.addr %s167, 4
        %s169 = scalar_lea.vmem %s0, %s168
        %s170 = smul.u32 2, %s17
        %s171 = smul.u32 2, %s17
        %v173 = vld [vmem:[%s1] sm:$0xf]
        %v174 = vld [vmem:[%s1 + $0x4] sm:$0xf]
        %v175 = vld [vmem:[%s1 + $0x8] sm:$0xf]
        %v176 = vld [vmem:[%s1 + $0xc] sm:$0xf]
        %v177 = vld [vmem:[%s1 + $0x10] sm:$0xf]
        %v178 = vld [vmem:[%s1 + $0x14] sm:$0xf]
        %v179 = vld [vmem:[%s1 + $0x18] sm:$0xf]
        %v180 = vld [vmem:[%s1 + $0x1c] sm:$0xf]
        %v181 = vld [vmem:[%s169] sm:$0xf]
        %v182 = vld [vmem:[%s169 + $0x4] sm:$0xf]
        %v183 = vld [vmem:[%s2] sm:$0xff]
        %v184 = vld [vmem:[%s2 + $0x8] sm:$0xff]
        %v187 = vunpack.c.l.b16 %v181
        %v188 = vunpack.c.l.b16 %v182
        %v189 = vpack.c.b16 %v188, %v187
        %v198 = vunpack.c.l.b16 %v173
        %v199 = vunpack.c.l.b16 %v174
        %v200 = vunpack.c.l.b16 %v175
        %v201 = vunpack.c.l.b16 %v176
        %v202 = vunpack.c.l.b16 %v177
        %v203 = vunpack.c.l.b16 %v178
        %v204 = vunpack.c.l.b16 %v179
        %v205 = vunpack.c.l.b16 %v180
        %v206 = vpack.c.b16 %v199, %v198
        %v207 = vpack.c.b16 %v201, %v200
        %v208 = vpack.c.b16 %v203, %v202
        %v209 = vpack.c.b16 %v205, %v204
        %vm214 = vcmask 523264
        %v216 = vsel %vm214, %v189, 0
        %218 = vmatprep.subr.bf16.mxu0 0
        %219 = vmatpush1.bf16.msra.mxu0 0
        %220 = vmatprep.subr.bf16.mxu0 0
        %221 = vmatpush1.bf16.msra.mxu0 0
        %222 = vmatprep.subr.bf16.mxu0 0
        %223 = vmatpush1.bf16.msra.mxu0 0
        %224 = vmatprep.subr.bf16.mxu0 0
        %225 = vmatpush1.bf16.msra.mxu0 0
        %226 = vmatprep.subr.bf16.mxu0 0
        %227 = vmatpush1.bf16.msra.mxu0 %v209
        %228 = vmatprep.subr.bf16.mxu0 0
        %229 = vmatpush1.bf16.msra.mxu0 %v208
        %230 = vmatprep.subr.bf16.mxu0 0
        %231 = vmatpush1.bf16.msra.mxu0 %v207
        %232 = vmatprep.subr.bf16.mxu0 0
        %233 = vmatpush1.bf16.msra.mxu0 %v206
        %234 = vmatprep.subr.bf16.mxu0 0
        %235 = vmatpush2.bf16.msra.mxu0 0
        %236 = vmatprep.subr.bf16.mxu0 0
        %237 = vmatpush2.bf16.msra.mxu0 0
        %238 = vmatprep.subr.bf16.mxu0 0
        %239 = vmatpush2.bf16.msra.mxu0 0
        %240 = vmatprep.subr.bf16.mxu0 0
        %241 = vmatpush2.bf16.msra.mxu0 0
        %242 = vmatprep.subr.bf16.mxu0 0
        %243 = vmatpush2.bf16.msra.mxu0 0
        %244 = vmatprep.subr.bf16.mxu0 0
        %245 = vmatpush2.bf16.msra.mxu0 0
        %246 = vmatprep.subr.bf16.mxu0 0
        %247 = vmatpush2.bf16.msra.mxu0 0
        %248 = vmatprep.subr.bf16.mxu0 0
        %249 = vmatpush2.bf16.msra.mxu0 0
        %250 = vmatprep.mubr.bf16.mxu0 0
        %251 = vmatmul.mubr.bf16.gmra.mxu0 %v216
        %v252 = vpop.f32.mrf.mxu0
        %v253 = vadd.f32 %v183, %v252
        %v254 = vpop.f32.mrf.mxu0
        %v255 = vpop.f32.mrf.mxu0
        %v256 = vadd.f32 %v184, %v255
        %v257 = vpop.f32.mrf.mxu0
        %258 = vdwg.mxu0
        %259 = vst [vmem:[%s164] sm:$0xff] %v253
        %260 = vst [vmem:[%s164 + $0x8] sm:$0xff] %v256
        %s261 = sand.u32 %s93, 1
        %s262 = scalar_lea.sflag [#allocation3], %s261
        %s263 = sand.u32 %s93, 1
        %s264 = smul.addr %s263, 16
        %s265 = scalar_lea.vmem [#allocation2], %s264
        // Predicated region
        $region33: #{patch_embedding_forward.1} parent=31 // pred_check
          %p266 = pneg %p103
        $region34: #{patch_embedding_forward.1} parent=31 // pred_check_branch
          %268 = sbr.rel (%p266) target = $region36
        $region35: #{patch_embedding_forward.1} parent=31 // pred_region
          %s269 = smul.u32 2, %s17
          %s271 = ssub.s32 256, 256
          %272 = vsyncadd %s262, %s271
          %s273 = smul.addr %s269, 128
          %s274 = scalar_lea.hbm %s3, %s273
          %s275 = sshll.u32 %s265, 4
          %s276 = int_to_ptr.vmem [resolvable:$true] %s275
          %281 = dma.vmem_to_hbm [thread:$0]  %s276, 256, %s274, %s262, 128, 128, 8
        $region36: #{patch_embedding_forward.1} parent=31 // pred_fallthru
          _
      $region32: #{patch_embedding_forward.1} parent=5 // pred_fallthru
        _
      %p282 = scmp.le.s32.totalorder 2, %s12
      // Predicated region
      $region37: #{patch_embedding_forward.1} parent=5 // pred_check
        %p283 = pneg %p282
      $region38: #{patch_embedding_forward.1} parent=5 // pred_check_branch
        %285 = sbr.rel (%p283) target = $region40
      $region39: #{patch_embedding_forward.1} parent=5 // pred_region
        %s286 = ssub.s32 %s12, 2
        // Predicated region
        $region41: #{patch_embedding_forward.1} parent=39 // pred_check
          %p287 = pneg %p109
        $region42: #{patch_embedding_forward.1} parent=39 // pred_check_branch
          %289 = sbr.rel (%p287) target = $region44
        $region43: #{patch_embedding_forward.1} parent=39 // pred_region
          %s290 = sand.u32 %s94, 1
          %s291 = scalar_lea.sflag [#allocation3], %s290
          %s292 = sand.u32 %s94, 1
          %s293 = smul.addr %s292, 16
          %s294 = scalar_lea.vmem [#allocation2], %s293
          %295 = dma.done %s291, 256
        $region44: #{patch_embedding_forward.1} parent=39 // pred_fallthru
          _
      $region40: #{patch_embedding_forward.1} parent=5 // pred_fallthru
        _
    $region6: #{patch_embedding_forward.1} parent=1 // loop_footer
      %s16 = sadd.s32 1, %s12
    $region7: #{patch_embedding_forward.1} parent=1 // loop_footer_branch
      %11 = sbr.rel target = $region3
    $region8: #{patch_embedding_forward.1} parent=1 // loop_exit
      _
    %296 = vsyncpa [#allocation3], 1
    %s297 = scalar_lea.sflag [#allocation3], 1
    %298 = vsyncpa %s297, 1

</llo_original>
